<compile_context>
chip_gen: v5e
topology: v5e:2x2
jax: 0.10.0
libtpu: 0.0.40
codegen_flags: <defaults>
</compile_context>

<pallas_src>
import jax
import jax.numpy as jnp
from jax.experimental import pallas as pl
from jax.experimental.pallas import tpu as pltpu


def _ft_kernel(x1_ref, x2_ref, x3_ref,
               w1_ref, b1_ref, w2_ref, b2_ref, w3_ref, b3_ref,
               mask_ref, o_ref):
    """One grid step == Bt batch elements.

    x1_ref : (Bt*Z, DV*E) bf16   head    rows, (d, v, e) merged on the lane axis
    x2_ref : (Bt*X, DV*E) bf16   sibling rows
    x3_ref : (Bt*C, DV*E) bf16   child   rows
    w*_ref : (DV*E, DV*R) bf16   block-diagonal kron(I_DV, W) projection weights
    b*_ref : (1, DV*R)    f32    biases tiled over the DV blocks
    mask_ref:(DV, DV*R)   f32    mask[dv, dv'*R + r] = (dv' == dv)
    o_ref  : (Bt, Z, X*C*DV) f32 output block; lane axis = X*C*D*V (final layout)
    """
    Bt, Z, N = o_ref.shape
    DV, DVR = mask_ref.shape
    X = x2_ref.shape[0] // Bt
    C = x3_ref.shape[0] // Bt
    f32 = jnp.float32

    # Three projections with M merged over the whole batch block (bf16 MXU, f32 accumulate).
    g1 = jnp.dot(x1_ref[...], w1_ref[...], preferred_element_type=f32) + b1_ref[...]
    g2 = jnp.dot(x2_ref[...], w2_ref[...], preferred_element_type=f32) + b2_ref[...]
    g3 = jnp.dot(x3_ref[...], w3_ref[...], preferred_element_type=f32) + b3_ref[...]

    g1 = g1.reshape(Bt, Z, DVR)          # (Bt, Z, DV*R)
    g2 = g2.reshape(Bt, X, DVR)          # (Bt, X, DV*R)
    g3 = g3.reshape(Bt, C, DVR)          # (Bt, C, DV*R)

    # VPU expansion of (sibling * child) to the (x, c, dv) lane layout (no MXU, no exp matrix):
    #   rhs[b, x*C*DV + c*DV + dv, dv'*R + r] = g2[b,x,dv'R+r] * g3[b,c,dv'R+r] * (dv' == dv)
    rhs = (g2[:, :, None, None, :] * g3[:, None, :, None, :]
           * mask_ref[...]).reshape(Bt, X * C * DV, DVR)

    # Trilinear contraction as one batched MXU matmul (batch = Bt, M = Z, N = X*C*DV, K = DV*R):
    #   out[b, z, (x,c,dv)] = sum_r h1[b,z,dv,r] * h2[b,x,dv,r] * h3[b,c,dv,r]
    # Written straight to o_ref: dot_general result already has the final (Bt, Z, X*C*DV) layout.
    o_ref[...] = jnp.einsum('bzk,bnk->bzn', g1, rhs, preferred_element_type=f32)


def make_params(w1, b1, w2, b2, w3, b3, D, V, compute_dtype=jnp.bfloat16):
    """Precompute the kernel-resident constants ONCE (hoisted out of the forward pass).

    w*: (E, R) already transposed, b*: (1, R)."""
    E, R = w1.shape
    DV = D * V
    f32 = jnp.float32
    eye = jnp.eye(DV, dtype=f32)

    def wblk(w):     # kron(I_DV, W): (DV*E, DV*R), bf16 MXU operand
        return jnp.kron(eye, w.astype(f32)).astype(compute_dtype)

    def bblk(b):     # bias tiled over the DV blocks, kept f32 for the f32 bias add
        return jnp.tile(b.astype(f32).reshape(1, R), (1, DV))

    mask = jnp.repeat(eye, R, axis=1)    # (DV, DV*R): mask[dv, dv'*R+r] = (dv' == dv)
    return dict(w1=wblk(w1), b1=bblk(b1), w2=wblk(w2), b2=bblk(b2),
                w3=wblk(w3), b3=bblk(b3), mask=mask)


def _pick_bt(B, bytes_per_b, budget_bytes=4 * 1024 * 1024):
    """Largest divisor of B whose per-step footprint fits the budget, preferring to keep
    at least 2 grid steps so v7x can shard the batch axis across both TensorCores."""
    divs = [d for d in range(1, B + 1) if B % d == 0]
    fit = [d for d in divs if d * bytes_per_b <= budget_bytes] or [1]
    two_step = [d for d in fit if B // d >= 2]
    return max(two_step) if two_step else max(fit)


@jax.jit
def factorized_trilinear(x1, x2, x3, params):
    """x1:(B,Z,D,V,E) x2:(B,X,D,V,E) x3:(B,C,D,V,E); params from make_params().

    Returns (B, Z, X, C, D, V) float32, matching the PyTorch module."""
    B, Z, D, V, E = x1.shape
    X = x2.shape[1]
    C = x3.shape[1]
    DV = D * V
    KE = DV * E
    DVR = params['b1'].shape[1]
    N = X * C * DV
    f32 = jnp.float32
    cdt = params['w1'].dtype             # bf16 matmul operand dtype

    # Free (contiguous) reshapes only -- inputs consumed as 2-D (rows, DV*E) slabs, no transpose.
    x1r = x1.astype(cdt).reshape(B * Z, KE)
    x2r = x2.astype(cdt).reshape(B * X, KE)
    x3r = x3.astype(cdt).reshape(B * C, KE)

    # Per-batch-element footprint (bf16 inputs double-buffered, f32 output + intermediates).
    per_b = (2 * (Z + X + C) * KE * 2            # x1/x2/x3 blocks, double buffered
             + 2 * Z * N * 4                     # output block, double buffered
             + (N * DVR + (Z + X + C) * DVR + Z * N) * 4)   # f32 intermediates
    Bt = _pick_bt(B, per_b)
    grid = (B // Bt,)

    const2 = lambda b: (0, 0)                    # resident (stay in VMEM across all steps)

    out = pl.pallas_call(
        _ft_kernel,
        out_shape=jax.ShapeDtypeStruct((B, Z, N), f32),
        grid=grid,
        in_specs=[
            pl.BlockSpec((Bt * Z, KE), lambda b: (b, 0)),
            pl.BlockSpec((Bt * X, KE), lambda b: (b, 0)),
            pl.BlockSpec((Bt * C, KE), lambda b: (b, 0)),
            pl.BlockSpec((KE, DVR), const2),     # w1
            pl.BlockSpec((1, DVR), const2),      # b1
            pl.BlockSpec((KE, DVR), const2),     # w2
            pl.BlockSpec((1, DVR), const2),      # b2
            pl.BlockSpec((KE, DVR), const2),     # w3
            pl.BlockSpec((1, DVR), const2),      # b3
            pl.BlockSpec((DV, DVR), const2),     # block-diagonal dv mask
        ],
        out_specs=pl.BlockSpec((Bt, Z, N), lambda b: (b, 0, 0)),
        compiler_params=pltpu.CompilerParams(
            dimension_semantics=("parallel",),               # batch-block axis -> megacore
            vmem_limit_bytes=40 * 1024 * 1024),              # headroom vs v7x 64 MiB VMEM
    )(x1r, x2r, x3r,
      params['w1'], params['b1'], params['w2'], params['b2'],
      params['w3'], params['b3'], params['mask'])

    # Free trailing-dim split: (B, Z, X*C*D*V) -> (B, Z, X, C, D, V).
    return out.reshape(B, Z, X, C, D, V)


def _init_linear(key, in_size, r):
    """Deterministic init mimicking nn.Linear (uniform +-1/sqrt(in_size)).

    Returns W already transposed to (in_size, r) and bias as (1, r)."""
    kw, kb = jax.random.split(key)
    bound = 1.0 / (in_size ** 0.5)
    w = jax.random.uniform(kw, (in_size, r), jnp.float32, -bound, bound)
    b = jax.random.uniform(kb, (1, r), jnp.float32, -bound, bound)
    return w, b


if __name__ == "__main__":
    key = jax.random.PRNGKey(0)
    in_size, r = 32, 8
    B, Z, X, C, D, V = 4, 4, 4, 4, 2, 2      # Bt = 2 -> grid = (2,): exercises batch blocking

    k1, k2, k3, kx1, kx2, kx3 = jax.random.split(key, 6)
    w1, b1 = _init_linear(k1, in_size, r)
    w2, b2 = _init_linear(k2, in_size, r)
    w3, b3 = _init_linear(k3, in_size, r)

    x1 = jax.random.normal(kx1, (B, Z, D, V, in_size), jnp.float32)
    x2 = jax.random.normal(kx2, (B, X, D, V, in_size), jnp.float32)
    x3 = jax.random.normal(kx3, (B, C, D, V, in_size), jnp.float32)

    params = make_params(w1, b1, w2, b2, w3, b3, D, V)   # built once, reused every forward
    out = factorized_trilinear(x1, x2, x3, params)
    out = jax.block_until_ready(out)

    # Pure-JAX f32 reference for the PyTorch forward.
    h1 = x1 @ w1 + b1[0]
    h2 = x2 @ w2 + b2[0]
    h3 = x3 @ w3 + b3[0]
    ref = jnp.einsum('bzdve,bxdve,bcdve->bzxcdv', h1, h2, h3)

    assert out.shape == (B, Z, X, C, D, V), out.shape
    max_err = float(jnp.max(jnp.abs(out - ref)))
    # bf16 MXU operands with f32 accumulation -> loosened tolerance vs the f32 reference.
    assert jnp.allclose(out, ref, atol=5e-2, rtol=5e-2), f"mismatch vs reference, max_err={max_err}"
    print("KERNEL_OK")
</pallas_src>

<mosaic_0001>
module attributes {stable_mosaic.version = 11 : i64} {
  func.func @_ft_kernel(%arg0: i32, %arg1: memref<8x128xbf16, #tpu.memory_space<vmem>>, %arg2: memref<8x128xbf16, #tpu.memory_space<vmem>>, %arg3: memref<8x128xbf16, #tpu.memory_space<vmem>>, %arg4: memref<128x32xbf16, #tpu.memory_space<vmem>>, %arg5: memref<1x32xf32, #tpu.memory_space<vmem>>, %arg6: memref<128x32xbf16, #tpu.memory_space<vmem>>, %arg7: memref<1x32xf32, #tpu.memory_space<vmem>>, %arg8: memref<128x32xbf16, #tpu.memory_space<vmem>>, %arg9: memref<1x32xf32, #tpu.memory_space<vmem>>, %arg10: memref<4x32xf32, #tpu.memory_space<vmem>>, %arg11: memref<2x4x64xf32, #tpu.memory_space<vmem>>) attributes {dimension_semantics = [#tpu.dimension_semantics<parallel>], iteration_bounds = array<i64: 2>, scalar_prefetch = 0 : i64, scratch_operands = 0 : i64, tpu.core_type = #tpu.core_type<tc>, window_params = [{transform_indices = @transform_0, window_bounds = array<i64: 8, 128>}, {transform_indices = @transform_1, window_bounds = array<i64: 8, 128>}, {transform_indices = @transform_2, window_bounds = array<i64: 8, 128>}, {pipeline_mode = #tpu.pipeline_mode<synchronous>, transform_indices = @transform_3, window_bounds = array<i64: 128, 32>}, {pipeline_mode = #tpu.pipeline_mode<synchronous>, transform_indices = @transform_4, window_bounds = array<i64: 1, 32>}, {pipeline_mode = #tpu.pipeline_mode<synchronous>, transform_indices = @transform_5, window_bounds = array<i64: 128, 32>}, {pipeline_mode = #tpu.pipeline_mode<synchronous>, transform_indices = @transform_6, window_bounds = array<i64: 1, 32>}, {pipeline_mode = #tpu.pipeline_mode<synchronous>, transform_indices = @transform_7, window_bounds = array<i64: 128, 32>}, {pipeline_mode = #tpu.pipeline_mode<synchronous>, transform_indices = @transform_8, window_bounds = array<i64: 1, 32>}, {pipeline_mode = #tpu.pipeline_mode<synchronous>, transform_indices = @transform_9, window_bounds = array<i64: 4, 32>}, {transform_indices = @transform_10, window_bounds = array<i64: 2, 4, 64>}]} {
    %c0 = arith.constant 0 : index
    %c0_0 = arith.constant 0 : index
    %0 = vector.load %arg1[%c0, %c0_0] : memref<8x128xbf16, #tpu.memory_space<vmem>>, vector<8x128xbf16>
    %c0_1 = arith.constant 0 : index
    %c0_2 = arith.constant 0 : index
    %1 = vector.load %arg4[%c0_1, %c0_2] : memref<128x32xbf16, #tpu.memory_space<vmem>>, vector<128x32xbf16>
    %cst = arith.constant dense<0.000000e+00> : vector<8x32xf32>
    %2 = tpu.matmul %0, %1, %cst {dimension_numbers = #tpu.dot_dimension_numbers<[1], [0], [0], [1], [0, 0, 1, 1], [], []>} : vector<8x128xbf16>, vector<128x32xbf16>, vector<8x32xf32> -> vector<8x32xf32>
    %c0_3 = arith.constant 0 : index
    %c0_4 = arith.constant 0 : index
    %3 = vector.load %arg5[%c0_3, %c0_4] : memref<1x32xf32, #tpu.memory_space<vmem>>, vector<1x32xf32>
    %4 = vector.broadcast %3 : vector<1x32xf32> to vector<8x32xf32>
    %5 = arith.addf %2, %4 : vector<8x32xf32>
    %c0_5 = arith.constant 0 : index
    %c0_6 = arith.constant 0 : index
    %6 = vector.load %arg2[%c0_5, %c0_6] : memref<8x128xbf16, #tpu.memory_space<vmem>>, vector<8x128xbf16>
    %c0_7 = arith.constant 0 : index
    %c0_8 = arith.constant 0 : index
    %7 = vector.load %arg6[%c0_7, %c0_8] : memref<128x32xbf16, #tpu.memory_space<vmem>>, vector<128x32xbf16>
    %cst_9 = arith.constant dense<0.000000e+00> : vector<8x32xf32>
    %8 = tpu.matmul %6, %7, %cst_9 {dimension_numbers = #tpu.dot_dimension_numbers<[1], [0], [0], [1], [0, 0, 1, 1], [], []>} : vector<8x128xbf16>, vector<128x32xbf16>, vector<8x32xf32> -> vector<8x32xf32>
    %c0_10 = arith.constant 0 : index
    %c0_11 = arith.constant 0 : index
    %9 = vector.load %arg7[%c0_10, %c0_11] : memref<1x32xf32, #tpu.memory_space<vmem>>, vector<1x32xf32>
    %10 = vector.broadcast %9 : vector<1x32xf32> to vector<8x32xf32>
    %11 = arith.addf %8, %10 : vector<8x32xf32>
    %c0_12 = arith.constant 0 : index
    %c0_13 = arith.constant 0 : index
    %12 = vector.load %arg3[%c0_12, %c0_13] : memref<8x128xbf16, #tpu.memory_space<vmem>>, vector<8x128xbf16>
    %c0_14 = arith.constant 0 : index
    %c0_15 = arith.constant 0 : index
    %13 = vector.load %arg8[%c0_14, %c0_15] : memref<128x32xbf16, #tpu.memory_space<vmem>>, vector<128x32xbf16>
    %cst_16 = arith.constant dense<0.000000e+00> : vector<8x32xf32>
    %14 = tpu.matmul %12, %13, %cst_16 {dimension_numbers = #tpu.dot_dimension_numbers<[1], [0], [0], [1], [0, 0, 1, 1], [], []>} : vector<8x128xbf16>, vector<128x32xbf16>, vector<8x32xf32> -> vector<8x32xf32>
    %c0_17 = arith.constant 0 : index
    %c0_18 = arith.constant 0 : index
    %15 = vector.load %arg9[%c0_17, %c0_18] : memref<1x32xf32, #tpu.memory_space<vmem>>, vector<1x32xf32>
    %16 = vector.broadcast %15 : vector<1x32xf32> to vector<8x32xf32>
    %17 = arith.addf %14, %16 : vector<8x32xf32>
    %18 = vector.shape_cast %5 : vector<8x32xf32> to vector<2x4x32xf32>
    %19 = vector.shape_cast %11 : vector<8x32xf32> to vector<2x4x32xf32>
    %20 = vector.shape_cast %17 : vector<8x32xf32> to vector<2x4x32xf32>
    %21 = vector.shape_cast %19 : vector<2x4x32xf32> to vector<2x4x1x1x32xf32>
    %22 = vector.shape_cast %20 : vector<2x4x32xf32> to vector<2x1x4x1x32xf32>
    %23 = vector.broadcast %21 : vector<2x4x1x1x32xf32> to vector<2x4x4x1x32xf32>
    %24 = vector.broadcast %22 : vector<2x1x4x1x32xf32> to vector<2x4x4x1x32xf32>
    %25 = arith.mulf %23, %24 : vector<2x4x4x1x32xf32>
    %c0_19 = arith.constant 0 : index
    %c0_20 = arith.constant 0 : index
    %26 = vector.load %arg10[%c0_19, %c0_20] : memref<4x32xf32, #tpu.memory_space<vmem>>, vector<4x32xf32>
    %27 = vector.shape_cast %26 : vector<4x32xf32> to vector<1x1x1x4x32xf32>
    %28 = vector.broadcast %25 : vector<2x4x4x1x32xf32> to vector<2x4x4x4x32xf32>
    %29 = vector.broadcast %27 : vector<1x1x1x4x32xf32> to vector<2x4x4x4x32xf32>
    %30 = arith.mulf %28, %29 : vector<2x4x4x4x32xf32>
    %31 = vector.shape_cast %30 : vector<2x4x4x4x32xf32> to vector<2x64x32xf32>
    "tpu.trace_start"() <{level = 10 : i32, message = "bzk,bnk->bzn"}> : () -> ()
    %cst_21 = arith.constant dense<0.000000e+00> : vector<2x4x64xf32>
    %32 = tpu.matmul %18, %31, %cst_21 {dimension_numbers = #tpu.dot_dimension_numbers<[2], [2], [1], [1], [0, 0, 0, 1, 1, 1], [0], [0]>} : vector<2x4x32xf32>, vector<2x64x32xf32>, vector<2x4x64xf32> -> vector<2x4x64xf32>
    "tpu.trace_stop"() : () -> ()
    %c0_22 = arith.constant 0 : index
    %c0_23 = arith.constant 0 : index
    %c0_24 = arith.constant 0 : index
    %33 = vector.load %arg11[%c0_22, %c0_23, %c0_24] : memref<2x4x64xf32, #tpu.memory_space<vmem>>, vector<2x4x64xf32>
    tpu.vector_store %arg11[%c0_22, %c0_23, %c0_24], %32 {strides = array<i32>} : memref<2x4x64xf32, #tpu.memory_space<vmem>>, vector<2x4x64xf32>,
    return
  }
  func.func @transform_0(%arg0: i32) -> (i32, i32) {
    %c0_i32 = arith.constant 0 : i32
    %c0_i32_0 = arith.constant 0 : i32
    return %arg0, %c0_i32 : i32, i32
  }
  func.func @transform_1(%arg0: i32) -> (i32, i32) {
    %c0_i32 = arith.constant 0 : i32
    %c0_i32_0 = arith.constant 0 : i32
    return %arg0, %c0_i32 : i32, i32
  }
  func.func @transform_2(%arg0: i32) -> (i32, i32) {
    %c0_i32 = arith.constant 0 : i32
    %c0_i32_0 = arith.constant 0 : i32
    return %arg0, %c0_i32 : i32, i32
  }
  func.func @transform_3(%arg0: i32) -> (i32, i32) {
    %c0_i32 = arith.constant 0 : i32
    %c0_i32_0 = arith.constant 0 : i32
    %c0_i32_1 = arith.constant 0 : i32
    return %c0_i32, %c0_i32_0 : i32, i32
  }
  func.func @transform_4(%arg0: i32) -> (i32, i32) {
    %c0_i32 = arith.constant 0 : i32
    %c0_i32_0 = arith.constant 0 : i32
    %c0_i32_1 = arith.constant 0 : i32
    return %c0_i32, %c0_i32_0 : i32, i32
  }
  func.func @transform_5(%arg0: i32) -> (i32, i32) {
    %c0_i32 = arith.constant 0 : i32
    %c0_i32_0 = arith.constant 0 : i32
    %c0_i32_1 = arith.constant 0 : i32
    return %c0_i32, %c0_i32_0 : i32, i32
  }
  func.func @transform_6(%arg0: i32) -> (i32, i32) {
    %c0_i32 = arith.constant 0 : i32
    %c0_i32_0 = arith.constant 0 : i32
    %c0_i32_1 = arith.constant 0 : i32
    return %c0_i32, %c0_i32_0 : i32, i32
  }
  func.func @transform_7(%arg0: i32) -> (i32, i32) {
    %c0_i32 = arith.constant 0 : i32
    %c0_i32_0 = arith.constant 0 : i32
    %c0_i32_1 = arith.constant 0 : i32
    return %c0_i32, %c0_i32_0 : i32, i32
  }
  func.func @transform_8(%arg0: i32) -> (i32, i32) {
    %c0_i32 = arith.constant 0 : i32
    %c0_i32_0 = arith.constant 0 : i32
    %c0_i32_1 = arith.constant 0 : i32
    return %c0_i32, %c0_i32_0 : i32, i32
  }
  func.func @transform_9(%arg0: i32) -> (i32, i32) {
    %c0_i32 = arith.constant 0 : i32
    %c0_i32_0 = arith.constant 0 : i32
    %c0_i32_1 = arith.constant 0 : i32
    return %c0_i32, %c0_i32_0 : i32, i32
  }
  func.func @transform_10(%arg0: i32) -> (i32, i32, i32) {
    %c0_i32 = arith.constant 0 : i32
    %c0_i32_0 = arith.constant 0 : i32
    %c0_i32_1 = arith.constant 0 : i32
    return %arg0, %c0_i32, %c0_i32_0 : i32, i32, i32
  }
}

</mosaic_0001>

<llo_original>
// kernel: factorized_trilinear.1
$region0: #{factorized_trilinear.1}
  #allocation0 [shape = 'u32[]', space=smem, size = 0x4, offset = 0x4, fixed_abs, tag = 'smem constant byte address 0x4 - core index']
  #allocation1 [shape = 'u32[72,128]{1,0:T(1,128)}', space=vmem, size = 0x9000, scoped, tag = 'internal scratch']
  %s0 = inlined_call_operand.vmem [shape: bf16[16,128], index: 0, kind: input, shape index: {}]
  %s1 = inlined_call_operand.vmem [shape: bf16[16,128], index: 1, kind: input, shape index: {}]
  %s2 = inlined_call_operand.vmem [shape: bf16[16,128], index: 2, kind: input, shape index: {}]
  %s3 = inlined_call_operand.vmem [shape: bf16[128,32], index: 3, kind: input, shape index: {}]
  %s4 = inlined_call_operand.vmem [shape: f32[1,32], index: 4, kind: input, shape index: {}]
  %s5 = inlined_call_operand.vmem [shape: bf16[128,32], index: 5, kind: input, shape index: {}]
  %s6 = inlined_call_operand.vmem [shape: f32[1,32], index: 6, kind: input, shape index: {}]
  %s7 = inlined_call_operand.vmem [shape: bf16[128,32], index: 7, kind: input, shape index: {}]
  %s8 = inlined_call_operand.vmem [shape: f32[1,32], index: 8, kind: input, shape index: {}]
  %s9 = inlined_call_operand.vmem [shape: f32[4,32], index: 9, kind: input, shape index: {}]
  %s10 = inlined_call_operand.vmem [shape: f32[4,4,64], index: 10, kind: output, shape index: {}]
  %s11 = sld [smem:[#allocation0]]
  $region73: #{factorized_trilinear.1} parent=0
    _
  %s13 = ssub.s32 1, %s11
  %s14 = scalar_select 0, %s13, %s11
  loop: start=0, step=1, limit=4
  $region2: #{factorized_trilinear.1} parent=0 // loop_pre_header
    _
  $region3: #{factorized_trilinear.1} parent=0 // loop_header
    %s16 = sphi 0, %s20
    %p17 = scmp.ge.s32.totalorder %s16, 4
    %s26 = sphi 0, %s28
    %s29 = sphi 0, %s26
    %s30 = sphi 0, %s29
    %s46 = sphi 0, %s30
    %s52 = sphi 0, %s54
    %s55 = sphi 0, %s52
    %s56 = sphi 0, %s55
    %s72 = sphi 0, %s56
    %s78 = sphi 0, %s80
    %s81 = sphi 0, %s78
    %s82 = sphi 0, %s81
    %s98 = sphi 0, %s82
    %s102 = sphi 0, %s102
    %s104 = sphi 0, %s102
    %s105 = sphi 0, %s104
    %s119 = sphi 0, %s105
    %s123 = sphi 0, %s123
    %s125 = sphi 0, %s123
    %s126 = sphi 0, %s125
    %s140 = sphi 0, %s126
    %s144 = sphi 0, %s144
    %s146 = sphi 0, %s144
    %s147 = sphi 0, %s146
    %s161 = sphi 0, %s147
    %s165 = sphi 0, %s165
    %s167 = sphi 0, %s165
    %s168 = sphi 0, %s167
    %s182 = sphi 0, %s168
    %s186 = sphi 0, %s186
    %s188 = sphi 0, %s186
    %s189 = sphi 0, %s188
    %s203 = sphi 0, %s189
    %s207 = sphi 0, %s207
    %s209 = sphi 0, %s207
    %s210 = sphi 0, %s209
    %s224 = sphi 0, %s210
    %s228 = sphi 0, %s228
    %s230 = sphi 0, %s228
    %s231 = sphi 0, %s230
    %s245 = sphi 0, %s231
    %s251 = sphi 0, %s253
    %s254 = sphi 0, %s251
    %s255 = sphi 0, %s254
    %s271 = sphi 0, %s255
  $region4: #{factorized_trilinear.1} parent=0 // loop_header_branch
    %19 = sbr.rel (%p17) target = $region8
  $region5: #{factorized_trilinear.1} parent=0 // loop_body
    %s21 = ssub.s32 %s16, 1
    %s22 = ssub.s32 %s16, 2
    %s23 = sadd.s32 %s16, 1
    %s24 = ssub.s32 %s16, %s23
    %p25 = scmp.eq.s32.totalorder %s24, 0
    %s27 = sadd.s32 %s26, 1
    %s28 = scalar_select %p25, %s26, %s27
    %p31 = pneg %p25
    %p32 = scmp.eq.s32.totalorder %s16, 1
    %p33 = por %p31, %p32
    %p34 = scmp.ne.s32.totalorder %s26, %s29
    %p35 = scmp.eq.s32.totalorder %s16, 0
    %p36 = por %p34, %p35
    %p37 = scmp.ne.s32.totalorder %s26, %s29
    %p38 = scmp.eq.s32.totalorder %s21, 1
    %p39 = por %p37, %p38
    %p40 = scmp.ne.s32.totalorder %s29, %s30
    %p41 = scmp.eq.s32.totalorder %s21, 0
    %p42 = por %p40, %p41
    %p43 = scmp.ne.s32.totalorder %s29, %s30
    %p44 = scmp.eq.s32.totalorder %s22, 1
    %p45 = por %p43, %p44
    %p47 = scmp.ne.s32.totalorder %s30, %s46
    %p48 = scmp.eq.s32.totalorder %s22, 0
    %p49 = por %p47, %p48
    %s50 = ssub.s32 %s16, %s23
    %p51 = scmp.eq.s32.totalorder %s50, 0
    %s53 = sadd.s32 %s52, 1
    %s54 = scalar_select %p51, %s52, %s53
    %p57 = pneg %p51
    %p58 = scmp.eq.s32.totalorder %s16, 1
    %p59 = por %p57, %p58
    %p60 = scmp.ne.s32.totalorder %s52, %s55
    %p61 = scmp.eq.s32.totalorder %s16, 0
    %p62 = por %p60, %p61
    %p63 = scmp.ne.s32.totalorder %s52, %s55
    %p64 = scmp.eq.s32.totalorder %s21, 1
    %p65 = por %p63, %p64
    %p66 = scmp.ne.s32.totalorder %s55, %s56
    %p67 = scmp.eq.s32.totalorder %s21, 0
    %p68 = por %p66, %p67
    %p69 = scmp.ne.s32.totalorder %s55, %s56
    %p70 = scmp.eq.s32.totalorder %s22, 1
    %p71 = por %p69, %p70
    %p73 = scmp.ne.s32.totalorder %s56, %s72
    %p74 = scmp.eq.s32.totalorder %s22, 0
    %p75 = por %p73, %p74
    %s76 = ssub.s32 %s16, %s23
    %p77 = scmp.eq.s32.totalorder %s76, 0
    %s79 = sadd.s32 %s78, 1
    %s80 = scalar_select %p77, %s78, %s79
    %p83 = pneg %p77
    %p84 = scmp.eq.s32.totalorder %s16, 1
    %p85 = por %p83, %p84
    %p86 = scmp.ne.s32.totalorder %s78, %s81
    %p87 = scmp.eq.s32.totalorder %s16, 0
    %p88 = por %p86, %p87
    %p89 = scmp.ne.s32.totalorder %s78, %s81
    %p90 = scmp.eq.s32.totalorder %s21, 1
    %p91 = por %p89, %p90
    %p92 = scmp.ne.s32.totalorder %s81, %s82
    %p93 = scmp.eq.s32.totalorder %s21, 0
    %p94 = por %p92, %p93
    %p95 = scmp.ne.s32.totalorder %s81, %s82
    %p96 = scmp.eq.s32.totalorder %s22, 1
    %p97 = por %p95, %p96
    %p99 = scmp.ne.s32.totalorder %s82, %s98
    %p100 = scmp.eq.s32.totalorder %s22, 0
    %p101 = por %p99, %p100
    %s103 = sadd.s32 %s102, 1
    %p106 = scmp.eq.s32.totalorder %s16, 1
    %p107 = scmp.ne.s32.totalorder %s102, %s104
    %p108 = scmp.eq.s32.totalorder %s16, 0
    %p109 = por %p107, %p108
    %p110 = scmp.ne.s32.totalorder %s102, %s104
    %p111 = scmp.eq.s32.totalorder %s21, 1
    %p112 = por %p110, %p111
    %p113 = scmp.ne.s32.totalorder %s104, %s105
    %p114 = scmp.eq.s32.totalorder %s21, 0
    %p115 = por %p113, %p114
    %p116 = scmp.ne.s32.totalorder %s104, %s105
    %p117 = scmp.eq.s32.totalorder %s22, 1
    %p118 = por %p116, %p117
    %p120 = scmp.ne.s32.totalorder %s105, %s119
    %p121 = scmp.eq.s32.totalorder %s22, 0
    %p122 = por %p120, %p121
    %s124 = sadd.s32 %s123, 1
    %p127 = scmp.eq.s32.totalorder %s16, 1
    %p128 = scmp.ne.s32.totalorder %s123, %s125
    %p129 = scmp.eq.s32.totalorder %s16, 0
    %p130 = por %p128, %p129
    %p131 = scmp.ne.s32.totalorder %s123, %s125
    %p132 = scmp.eq.s32.totalorder %s21, 1
    %p133 = por %p131, %p132
    %p134 = scmp.ne.s32.totalorder %s125, %s126
    %p135 = scmp.eq.s32.totalorder %s21, 0
    %p136 = por %p134, %p135
    %p137 = scmp.ne.s32.totalorder %s125, %s126
    %p138 = scmp.eq.s32.totalorder %s22, 1
    %p139 = por %p137, %p138
    %p141 = scmp.ne.s32.totalorder %s126, %s140
    %p142 = scmp.eq.s32.totalorder %s22, 0
    %p143 = por %p141, %p142
    %s145 = sadd.s32 %s144, 1
    %p148 = scmp.eq.s32.totalorder %s16, 1
    %p149 = scmp.ne.s32.totalorder %s144, %s146
    %p150 = scmp.eq.s32.totalorder %s16, 0
    %p151 = por %p149, %p150
    %p152 = scmp.ne.s32.totalorder %s144, %s146
    %p153 = scmp.eq.s32.totalorder %s21, 1
    %p154 = por %p152, %p153
    %p155 = scmp.ne.s32.totalorder %s146, %s147
    %p156 = scmp.eq.s32.totalorder %s21, 0
    %p157 = por %p155, %p156
    %p158 = scmp.ne.s32.totalorder %s146, %s147
    %p159 = scmp.eq.s32.totalorder %s22, 1
    %p160 = por %p158, %p159
    %p162 = scmp.ne.s32.totalorder %s147, %s161
    %p163 = scmp.eq.s32.totalorder %s22, 0
    %p164 = por %p162, %p163
    %s166 = sadd.s32 %s165, 1
    %p169 = scmp.eq.s32.totalorder %s16, 1
    %p170 = scmp.ne.s32.totalorder %s165, %s167
    %p171 = scmp.eq.s32.totalorder %s16, 0
    %p172 = por %p170, %p171
    %p173 = scmp.ne.s32.totalorder %s165, %s167
    %p174 = scmp.eq.s32.totalorder %s21, 1
    %p175 = por %p173, %p174
    %p176 = scmp.ne.s32.totalorder %s167, %s168
    %p177 = scmp.eq.s32.totalorder %s21, 0
    %p178 = por %p176, %p177
    %p179 = scmp.ne.s32.totalorder %s167, %s168
    %p180 = scmp.eq.s32.totalorder %s22, 1
    %p181 = por %p179, %p180
    %p183 = scmp.ne.s32.totalorder %s168, %s182
    %p184 = scmp.eq.s32.totalorder %s22, 0
    %p185 = por %p183, %p184
    %s187 = sadd.s32 %s186, 1
    %p190 = scmp.eq.s32.totalorder %s16, 1
    %p191 = scmp.ne.s32.totalorder %s186, %s188
    %p192 = scmp.eq.s32.totalorder %s16, 0
    %p193 = por %p191, %p192
    %p194 = scmp.ne.s32.totalorder %s186, %s188
    %p195 = scmp.eq.s32.totalorder %s21, 1
    %p196 = por %p194, %p195
    %p197 = scmp.ne.s32.totalorder %s188, %s189
    %p198 = scmp.eq.s32.totalorder %s21, 0
    %p199 = por %p197, %p198
    %p200 = scmp.ne.s32.totalorder %s188, %s189
    %p201 = scmp.eq.s32.totalorder %s22, 1
    %p202 = por %p200, %p201
    %p204 = scmp.ne.s32.totalorder %s189, %s203
    %p205 = scmp.eq.s32.totalorder %s22, 0
    %p206 = por %p204, %p205
    %s208 = sadd.s32 %s207, 1
    %p211 = scmp.eq.s32.totalorder %s16, 1
    %p212 = scmp.ne.s32.totalorder %s207, %s209
    %p213 = scmp.eq.s32.totalorder %s16, 0
    %p214 = por %p212, %p213
    %p215 = scmp.ne.s32.totalorder %s207, %s209
    %p216 = scmp.eq.s32.totalorder %s21, 1
    %p217 = por %p215, %p216
    %p218 = scmp.ne.s32.totalorder %s209, %s210
    %p219 = scmp.eq.s32.totalorder %s21, 0
    %p220 = por %p218, %p219
    %p221 = scmp.ne.s32.totalorder %s209, %s210
    %p222 = scmp.eq.s32.totalorder %s22, 1
    %p223 = por %p221, %p222
    %p225 = scmp.ne.s32.totalorder %s210, %s224
    %p226 = scmp.eq.s32.totalorder %s22, 0
    %p227 = por %p225, %p226
    %s229 = sadd.s32 %s228, 1
    %p232 = scmp.eq.s32.totalorder %s16, 1
    %p233 = scmp.ne.s32.totalorder %s228, %s230
    %p234 = scmp.eq.s32.totalorder %s16, 0
    %p235 = por %p233, %p234
    %p236 = scmp.ne.s32.totalorder %s228, %s230
    %p237 = scmp.eq.s32.totalorder %s21, 1
    %p238 = por %p236, %p237
    %p239 = scmp.ne.s32.totalorder %s230, %s231
    %p240 = scmp.eq.s32.totalorder %s21, 0
    %p241 = por %p239, %p240
    %p242 = scmp.ne.s32.totalorder %s230, %s231
    %p243 = scmp.eq.s32.totalorder %s22, 1
    %p244 = por %p242, %p243
    %p246 = scmp.ne.s32.totalorder %s231, %s245
    %p247 = scmp.eq.s32.totalorder %s22, 0
    %p248 = por %p246, %p247
    %s249 = ssub.s32 %s16, %s23
    %p250 = scmp.eq.s32.totalorder %s249, 0
    %s252 = sadd.s32 %s251, 1
    %s253 = scalar_select %p250, %s251, %s252
    %p256 = pneg %p250
    %p257 = scmp.eq.s32.totalorder %s16, 1
    %p258 = por %p256, %p257
    %p259 = scmp.ne.s32.totalorder %s251, %s254
    %p260 = scmp.eq.s32.totalorder %s16, 0
    %p261 = por %p259, %p260
    %p262 = scmp.ne.s32.totalorder %s251, %s254
    %p263 = scmp.eq.s32.totalorder %s21, 1
    %p264 = por %p262, %p263
    %p265 = scmp.ne.s32.totalorder %s254, %s255
    %p266 = scmp.eq.s32.totalorder %s21, 0
    %p267 = por %p265, %p266
    %p268 = scmp.ne.s32.totalorder %s254, %s255
    %p269 = scmp.eq.s32.totalorder %s22, 1
    %p270 = por %p268, %p269
    %p272 = scmp.ne.s32.totalorder %s255, %s271
    %p273 = scmp.eq.s32.totalorder %s22, 0
    %p274 = por %p272, %p273
    %p275 = scmp.le.s32.totalorder 1, %s16
    %p276 = scmp.lt.s32.totalorder %s16, 3
    %p277 = pnand %p275, %p276
    %p278 = pneg %p277
    // Predicated region
    $region9: #{factorized_trilinear.1} parent=5 // pred_check
      _
    $region10: #{factorized_trilinear.1} parent=5 // pred_check_branch
      %280 = sbr.rel (%p277) target = $region12
    $region11: #{factorized_trilinear.1} parent=5 // pred_region
      %s281 = ssub.s32 %s16, 1
      // Predicated region
      $region13: #{factorized_trilinear.1} parent=11 // pred_check
        %p282 = pneg %p115
      $region14: #{factorized_trilinear.1} parent=11 // pred_check_branch
        %284 = sbr.rel (%p282) target = $region16
      $region15: #{factorized_trilinear.1} parent=11 // pred_region
        _
      $region16: #{factorized_trilinear.1} parent=11 // pred_fallthru
        _
      // Predicated region
      $region17: #{factorized_trilinear.1} parent=11 // pred_check
        %p285 = pneg %p136
      $region18: #{factorized_trilinear.1} parent=11 // pred_check_branch
        %287 = sbr.rel (%p285) target = $region20
      $region19: #{factorized_trilinear.1} parent=11 // pred_region
        _
      $region20: #{factorized_trilinear.1} parent=11 // pred_fallthru
        _
      // Predicated region
      $region21: #{factorized_trilinear.1} parent=11 // pred_check
        %p288 = pneg %p157
      $region22: #{factorized_trilinear.1} parent=11 // pred_check_branch
        %290 = sbr.rel (%p288) target = $region24
      $region23: #{factorized_trilinear.1} parent=11 // pred_region
        _
      $region24: #{factorized_trilinear.1} parent=11 // pred_fallthru
        _
      // Predicated region
      $region25: #{factorized_trilinear.1} parent=11 // pred_check
        %p291 = pneg %p178
      $region26: #{factorized_trilinear.1} parent=11 // pred_check_branch
        %293 = sbr.rel (%p291) target = $region28
      $region27: #{factorized_trilinear.1} parent=11 // pred_region
        _
      $region28: #{factorized_trilinear.1} parent=11 // pred_fallthru
        _
      // Predicated region
      $region29: #{factorized_trilinear.1} parent=11 // pred_check
        %p294 = pneg %p199
      $region30: #{factorized_trilinear.1} parent=11 // pred_check_branch
        %296 = sbr.rel (%p294) target = $region32
      $region31: #{factorized_trilinear.1} parent=11 // pred_region
        _
      $region32: #{factorized_trilinear.1} parent=11 // pred_fallthru
        _
      // Predicated region
      $region33: #{factorized_trilinear.1} parent=11 // pred_check
        %p297 = pneg %p220
      $region34: #{factorized_trilinear.1} parent=11 // pred_check_branch
        %299 = sbr.rel (%p297) target = $region36
      $region35: #{factorized_trilinear.1} parent=11 // pred_region
        _
      $region36: #{factorized_trilinear.1} parent=11 // pred_fallthru
        _
      // Predicated region
      $region37: #{factorized_trilinear.1} parent=11 // pred_check
        %p300 = pneg %p241
      $region38: #{factorized_trilinear.1} parent=11 // pred_check_branch
        %302 = sbr.rel (%p300) target = $region40
      $region39: #{factorized_trilinear.1} parent=11 // pred_region
        _
      $region40: #{factorized_trilinear.1} parent=11 // pred_fallthru
        _
    $region12: #{factorized_trilinear.1} parent=5 // pred_fallthru
      _
    %p303 = scmp.lt.s32.totalorder %s16, 2
    // Predicated region
    $region41: #{factorized_trilinear.1} parent=5 // pred_check
      %p304 = pneg %p303
    $region42: #{factorized_trilinear.1} parent=5 // pred_check_branch
      %306 = sbr.rel (%p304) target = $region44
    $region43: #{factorized_trilinear.1} parent=5 // pred_region
      // Predicated region
      $region45: #{factorized_trilinear.1} parent=43 // pred_check
        %p307 = pneg %p36
      $region46: #{factorized_trilinear.1} parent=43 // pred_check_branch
        %309 = sbr.rel (%p307) target = $region48
      $region47: #{factorized_trilinear.1} parent=43 // pred_region
        %p310 = scmp.lt.s32.totalorder %s16, 1
        %s311 = scalar_select %p310, %s16, 1
        %s312 = smul.addr %s311, 4
        %s313 = scalar_lea.vmem %s0, %s312
      $region48: #{factorized_trilinear.1} parent=43 // pred_fallthru
        _
      // Predicated region
      $region49: #{factorized_trilinear.1} parent=43 // pred_check
        %p314 = pneg %p62
      $region50: #{factorized_trilinear.1} parent=43 // pred_check_branch
        %316 = sbr.rel (%p314) target = $region52
      $region51: #{factorized_trilinear.1} parent=43 // pred_region
        %p317 = scmp.lt.s32.totalorder %s16, 1
        %s318 = scalar_select %p317, %s16, 1
        %s319 = smul.addr %s318, 4
        %s320 = scalar_lea.vmem %s1, %s319
      $region52: #{factorized_trilinear.1} parent=43 // pred_fallthru
        _
      // Predicated region
      $region53: #{factorized_trilinear.1} parent=43 // pred_check
        %p321 = pneg %p88
      $region54: #{factorized_trilinear.1} parent=43 // pred_check_branch
        %323 = sbr.rel (%p321) target = $region56
      $region55: #{factorized_trilinear.1} parent=43 // pred_region
        %p324 = scmp.lt.s32.totalorder %s16, 1
        %s325 = scalar_select %p324, %s16, 1
        %s326 = smul.addr %s325, 4
        %s327 = scalar_lea.vmem %s2, %s326
      $region56: #{factorized_trilinear.1} parent=43 // pred_fallthru
        _
    $region44: #{factorized_trilinear.1} parent=5 // pred_fallthru
      _
    %p328 = scmp.le.s32.totalorder 1, %s16
    %p329 = scmp.lt.s32.totalorder %s16, 3
    %p330 = pnand %p328, %p329
    %p331 = pneg %p330
    // Predicated region
    $region57: #{factorized_trilinear.1} parent=5 // pred_check
      _
    $region58: #{factorized_trilinear.1} parent=5 // pred_check_branch
      %333 = sbr.rel (%p330) target = $region60
    $region59: #{factorized_trilinear.1} parent=5 // pred_region
      %s334 = ssub.s32 %s16, 1
      %p335 = scmp.lt.s32.totalorder %s21, 1
      %s336 = scalar_select %p335, %s21, 1
      %s337 = smul.addr %s336, 4
      %s338 = scalar_lea.vmem %s0, %s337
      %p339 = pneg %p42
      %p340 = pneg %p39
      %p341 = scmp.lt.s32.totalorder %s21, 1
      %s342 = scalar_select %p341, %s21, 1
      %s343 = smul.addr %s342, 4
      %s344 = scalar_lea.vmem %s1, %s343
      %p345 = pneg %p68
      %p346 = pneg %p65
      %p347 = scmp.lt.s32.totalorder %s21, 1
      %s348 = scalar_select %p347, %s21, 1
      %s349 = smul.addr %s348, 4
      %s350 = scalar_lea.vmem %s2, %s349
      %p351 = pneg %p94
      %p352 = pneg %p91
      %p353 = pneg %p115
      %p354 = pneg %p112
      %p355 = pneg %p136
      %p356 = pneg %p133
      %p357 = pneg %p157
      %p358 = pneg %p154
      %p359 = pneg %p178
      %p360 = pneg %p175
      %p361 = pneg %p199
      %p362 = pneg %p196
      %p363 = pneg %p220
      %p364 = pneg %p217
      %p365 = pneg %p241
      %p366 = pneg %p238
      %p367 = pneg %p267
      %p368 = pneg %p264
      %s369 = smul.u32 2, %s21
      %p370 = scmp.lt.s32.totalorder %s369, 3
      %s371 = scalar_select %p370, %s369, 3
      %s372 = smul.addr %s371, 4
      %s373 = scalar_lea.vmem %s10, %s372
      %p374 = scmp.lt.s32.totalorder %s21, 1
      %s375 = scalar_select %p374, %s21, 1
      %s376 = smul.addr %s375, 4
      %s377 = scalar_lea.vmem %s0, %s376
      %p378 = scmp.lt.s32.totalorder %s21, 1
      %s379 = scalar_select %p378, %s21, 1
      %s380 = smul.addr %s379, 4
      %s381 = scalar_lea.vmem %s1, %s380
      %p382 = scmp.lt.s32.totalorder %s21, 1
      %s383 = scalar_select %p382, %s21, 1
      %s384 = smul.addr %s383, 4
      %s385 = scalar_lea.vmem %s2, %s384
      %s386 = smul.u32 2, %s21
      %p387 = scmp.lt.s32.totalorder %s386, 3
      %s388 = scalar_select %p387, %s386, 3
      %s389 = smul.addr %s388, 4
      %s390 = scalar_lea.vmem %s10, %s389
      %s391 = smul.u32 2, %s21
      %v392 = vld [vmem:[%s377] sm:$0xf]
      %v393 = vld [vmem:[%s3] sm:$0xf]
      %v394 = vld [vmem:[%s3 + $0x4] sm:$0xf]
      %v395 = vld [vmem:[%s3 + $0x8] sm:$0xf]
      %v396 = vld [vmem:[%s3 + $0xc] sm:$0xf]
      %v397 = vld [vmem:[%s3 + $0x10] sm:$0xf]
      %v398 = vld [vmem:[%s3 + $0x14] sm:$0xf]
      %v399 = vld [vmem:[%s3 + $0x18] sm:$0xf]
      %v400 = vld [vmem:[%s3 + $0x1c] sm:$0xf]
      %v401 = vld [vmem:[%s3 + $0x20] sm:$0xf]
      %v402 = vld [vmem:[%s3 + $0x24] sm:$0xf]
      %v403 = vld [vmem:[%s3 + $0x28] sm:$0xf]
      %v404 = vld [vmem:[%s3 + $0x2c] sm:$0xf]
      %v405 = vld [vmem:[%s3 + $0x30] sm:$0xf]
      %v406 = vld [vmem:[%s3 + $0x34] sm:$0xf]
      %v407 = vld [vmem:[%s3 + $0x38] sm:$0xf]
      %v408 = vld [vmem:[%s3 + $0x3c] sm:$0xf]
      %v409 = vld [vmem:[%s4] sm:$0x1]
      %v411 = vperm.slane %v409, 0
      %v429 = vunpack.c.l.b16 %v393
      %v430 = vunpack.c.l.b16 %v394
      %v431 = vunpack.c.l.b16 %v395
      %v432 = vunpack.c.l.b16 %v396
      %v433 = vunpack.c.l.b16 %v397
      %v434 = vunpack.c.l.b16 %v398
      %v435 = vunpack.c.l.b16 %v399
      %v436 = vunpack.c.l.b16 %v400
      %v437 = vunpack.c.l.b16 %v401
      %v438 = vunpack.c.l.b16 %v402
      %v439 = vunpack.c.l.b16 %v403
      %v440 = vunpack.c.l.b16 %v404
      %v441 = vunpack.c.l.b16 %v405
      %v442 = vunpack.c.l.b16 %v406
      %v443 = vunpack.c.l.b16 %v407
      %v444 = vunpack.c.l.b16 %v408
      %v445 = vpack.c.b16 %v430, %v429
      %v446 = vpack.c.b16 %v432, %v431
      %v447 = vpack.c.b16 %v434, %v433
      %v448 = vpack.c.b16 %v436, %v435
      %v449 = vpack.c.b16 %v438, %v437
      %v450 = vpack.c.b16 %v440, %v439
      %v451 = vpack.c.b16 %v442, %v441
      %v452 = vpack.c.b16 %v444, %v443
      %461 = vmatpush.bf16.msra.mxu0 %v452
      %462 = vmatpush.bf16.msra.mxu0 %v451
      %463 = vmatpush.bf16.msra.mxu0 %v450
      %464 = vmatpush.bf16.msra.mxu0 %v449
      %465 = vmatpush.bf16.msra.mxu0 %v448
      %466 = vmatpush.bf16.msra.mxu0 %v447
      %467 = vmatpush.bf16.msra.mxu0 %v446
      %468 = vmatpush.bf16.msra.mxu0 %v445
      %469 = vmatmul.bf16.gmra.mxu0 %v392
      %v470 = vpop.f32.mrf.mxu0
      %v471 = vadd.f32 %v411, %v470
      %v472 = vpop.f32.mrf.mxu0
      %473 = vdwg.mxu0
      %v474 = vld [vmem:[%s381] sm:$0xf]
      %v475 = vld [vmem:[%s5] sm:$0xf]
      %v476 = vld [vmem:[%s5 + $0x4] sm:$0xf]
      %v477 = vld [vmem:[%s5 + $0x8] sm:$0xf]
      %v478 = vld [vmem:[%s5 + $0xc] sm:$0xf]
      %v479 = vld [vmem:[%s5 + $0x10] sm:$0xf]
      %v480 = vld [vmem:[%s5 + $0x14] sm:$0xf]
      %v481 = vld [vmem:[%s5 + $0x18] sm:$0xf]
      %v482 = vld [vmem:[%s5 + $0x1c] sm:$0xf]
      %v483 = vld [vmem:[%s5 + $0x20] sm:$0xf]
      %v484 = vld [vmem:[%s5 + $0x24] sm:$0xf]
      %v485 = vld [vmem:[%s5 + $0x28] sm:$0xf]
      %v486 = vld [vmem:[%s5 + $0x2c] sm:$0xf]
      %v487 = vld [vmem:[%s5 + $0x30] sm:$0xf]
      %v488 = vld [vmem:[%s5 + $0x34] sm:$0xf]
      %v489 = vld [vmem:[%s5 + $0x38] sm:$0xf]
      %v490 = vld [vmem:[%s5 + $0x3c] sm:$0xf]
      %v491 = vld [vmem:[%s6] sm:$0x1]
      %v493 = vperm.slane %v491, 0
      %v511 = vunpack.c.l.b16 %v475
      %v512 = vunpack.c.l.b16 %v476
      %v513 = vunpack.c.l.b16 %v477
      %v514 = vunpack.c.l.b16 %v478
      %v515 = vunpack.c.l.b16 %v479
      %v516 = vunpack.c.l.b16 %v480
      %v517 = vunpack.c.l.b16 %v481
      %v518 = vunpack.c.l.b16 %v482
      %v519 = vunpack.c.l.b16 %v483
      %v520 = vunpack.c.l.b16 %v484
      %v521 = vunpack.c.l.b16 %v485
      %v522 = vunpack.c.l.b16 %v486
      %v523 = vunpack.c.l.b16 %v487
      %v524 = vunpack.c.l.b16 %v488
      %v525 = vunpack.c.l.b16 %v489
      %v526 = vunpack.c.l.b16 %v490
      %v527 = vpack.c.b16 %v512, %v511
      %v528 = vpack.c.b16 %v514, %v513
      %v529 = vpack.c.b16 %v516, %v515
      %v530 = vpack.c.b16 %v518, %v517
      %v531 = vpack.c.b16 %v520, %v519
      %v532 = vpack.c.b16 %v522, %v521
      %v533 = vpack.c.b16 %v524, %v523
      %v534 = vpack.c.b16 %v526, %v525
      %543 = vmatpush.bf16.msra.mxu0 %v534
      %544 = vmatpush.bf16.msra.mxu0 %v533
      %545 = vmatpush.bf16.msra.mxu0 %v532
      %546 = vmatpush.bf16.msra.mxu0 %v531
      %547 = vmatpush.bf16.msra.mxu0 %v530
      %548 = vmatpush.bf16.msra.mxu0 %v529
      %549 = vmatpush.bf16.msra.mxu0 %v528
      %550 = vmatpush.bf16.msra.mxu0 %v527
      %551 = vmatmul.bf16.gmra.mxu0 %v474
      %v552 = vpop.f32.mrf.mxu0
      %v553 = vadd.f32 %v493, %v552
      %v554 = vpop.f32.mrf.mxu0
      %555 = vdwg.mxu0
      %v556 = vld [vmem:[%s385] sm:$0xf]
      %v557 = vld [vmem:[%s7] sm:$0xf]
      %v558 = vld [vmem:[%s7 + $0x4] sm:$0xf]
      %v559 = vld [vmem:[%s7 + $0x8] sm:$0xf]
      %v560 = vld [vmem:[%s7 + $0xc] sm:$0xf]
      %v561 = vld [vmem:[%s7 + $0x10] sm:$0xf]
      %v562 = vld [vmem:[%s7 + $0x14] sm:$0xf]
      %v563 = vld [vmem:[%s7 + $0x18] sm:$0xf]
      %v564 = vld [vmem:[%s7 + $0x1c] sm:$0xf]
      %v565 = vld [vmem:[%s7 + $0x20] sm:$0xf]
      %v566 = vld [vmem:[%s7 + $0x24] sm:$0xf]
      %v567 = vld [vmem:[%s7 + $0x28] sm:$0xf]
      %v568 = vld [vmem:[%s7 + $0x2c] sm:$0xf]
      %v569 = vld [vmem:[%s7 + $0x30] sm:$0xf]
      %v570 = vld [vmem:[%s7 + $0x34] sm:$0xf]
      %v571 = vld [vmem:[%s7 + $0x38] sm:$0xf]
      %v572 = vld [vmem:[%s7 + $0x3c] sm:$0xf]
      %v573 = vld [vmem:[%s8] sm:$0x1]
      %v575 = vperm.slane %v573, 0
      %v593 = vunpack.c.l.b16 %v557
      %v594 = vunpack.c.l.b16 %v558
      %v595 = vunpack.c.l.b16 %v559
      %v596 = vunpack.c.l.b16 %v560
      %v597 = vunpack.c.l.b16 %v561
      %v598 = vunpack.c.l.b16 %v562
      %v599 = vunpack.c.l.b16 %v563
      %v600 = vunpack.c.l.b16 %v564
      %v601 = vunpack.c.l.b16 %v565
      %v602 = vunpack.c.l.b16 %v566
      %v603 = vunpack.c.l.b16 %v567
      %v604 = vunpack.c.l.b16 %v568
      %v605 = vunpack.c.l.b16 %v569
      %v606 = vunpack.c.l.b16 %v570
      %v607 = vunpack.c.l.b16 %v571
      %v608 = vunpack.c.l.b16 %v572
      %v609 = vpack.c.b16 %v594, %v593
      %v610 = vpack.c.b16 %v596, %v595
      %v611 = vpack.c.b16 %v598, %v597
      %v612 = vpack.c.b16 %v600, %v599
      %v613 = vpack.c.b16 %v602, %v601
      %v614 = vpack.c.b16 %v604, %v603
      %v615 = vpack.c.b16 %v606, %v605
      %v616 = vpack.c.b16 %v608, %v607
      %625 = vmatpush.bf16.msra.mxu0 %v616
      %626 = vmatpush.bf16.msra.mxu0 %v615
      %627 = vmatpush.bf16.msra.mxu0 %v614
      %628 = vmatpush.bf16.msra.mxu0 %v613
      %629 = vmatpush.bf16.msra.mxu0 %v612
      %630 = vmatpush.bf16.msra.mxu0 %v611
      %631 = vmatpush.bf16.msra.mxu0 %v610
      %632 = vmatpush.bf16.msra.mxu0 %v609
      %633 = vmatmul.bf16.gmra.mxu0 %v556
      %v634 = vpop.f32.mrf.mxu0
      %v635 = vadd.f32 %v575, %v634
      %v636 = vpop.f32.mrf.mxu0
      %637 = vdwg.mxu0
      %v639 = vrot.slane %v471, 4
      %v641 = vrot.slane %v553, 1
      %v642 = vrot.slane %v553, 2
      %v643 = vrot.slane %v553, 3
      %v644 = vrot.slane %v553, 4
      %v645 = vrot.slane %v553, 5
      %v646 = vrot.slane %v553, 6
      %v647 = vrot.slane %v553, 7
      %v656 = vrot.slane %v635, 1
      %v657 = vrot.slane %v635, 2
      %v658 = vrot.slane %v635, 3
      %v659 = vrot.slane %v635, 4
      %v660 = vrot.slane %v635, 5
      %v661 = vrot.slane %v635, 6
      %v662 = vrot.slane %v635, 7
      %v670 = vmul.f32 %v553, %v635
      %v671 = vmul.f32 %v553, %v656
      %v672 = vmul.f32 %v553, %v657
      %v673 = vmul.f32 %v553, %v658
      %v674 = vmul.f32 %v641, %v635
      %v675 = vmul.f32 %v641, %v656
      %v676 = vmul.f32 %v641, %v657
      %v677 = vmul.f32 %v641, %v658
      %v678 = vmul.f32 %v642, %v635
      %v679 = vmul.f32 %v642, %v656
      %v680 = vmul.f32 %v642, %v657
      %v681 = vmul.f32 %v642, %v658
      %v682 = vmul.f32 %v643, %v635
      %v683 = vmul.f32 %v643, %v656
      %v684 = vmul.f32 %v643, %v657
      %v685 = vmul.f32 %v643, %v658
      %v686 = vmul.f32 %v644, %v659
      %v687 = vmul.f32 %v644, %v660
      %v688 = vmul.f32 %v644, %v661
      %v689 = vmul.f32 %v644, %v662
      %v690 = vmul.f32 %v645, %v659
      %v691 = vmul.f32 %v645, %v660
      %v692 = vmul.f32 %v645, %v661
      %v693 = vmul.f32 %v645, %v662
      %v694 = vmul.f32 %v646, %v659
      %v695 = vmul.f32 %v646, %v660
      %v696 = vmul.f32 %v646, %v661
      %v697 = vmul.f32 %v646, %v662
      %v698 = vmul.f32 %v647, %v659
      %v699 = vmul.f32 %v647, %v660
      %v700 = vmul.f32 %v647, %v661
      %v701 = vmul.f32 %v647, %v662
      %v702 = vld [vmem:[%s9] sm:$0xf]
      %v735 = vperm.slane %v670, 0
      %v736 = vperm.slane %v671, 0
      %v737 = vperm.slane %v672, 0
      %v738 = vperm.slane %v673, 0
      %v739 = vperm.slane %v674, 0
      %v740 = vperm.slane %v675, 0
      %v741 = vperm.slane %v676, 0
      %v742 = vperm.slane %v677, 0
      %v743 = vperm.slane %v678, 0
      %v744 = vperm.slane %v679, 0
      %v745 = vperm.slane %v680, 0
      %v746 = vperm.slane %v681, 0
      %v747 = vperm.slane %v682, 0
      %v748 = vperm.slane %v683, 0
      %v749 = vperm.slane %v684, 0
      %v750 = vperm.slane %v685, 0
      %v751 = vperm.slane %v686, 0
      %v752 = vperm.slane %v687, 0
      %v753 = vperm.slane %v688, 0
      %v754 = vperm.slane %v689, 0
      %v755 = vperm.slane %v690, 0
      %v756 = vperm.slane %v691, 0
      %v757 = vperm.slane %v692, 0
      %v758 = vperm.slane %v693, 0
      %v759 = vperm.slane %v694, 0
      %v760 = vperm.slane %v695, 0
      %v761 = vperm.slane %v696, 0
      %v762 = vperm.slane %v697, 0
      %v763 = vperm.slane %v698, 0
      %v764 = vperm.slane %v699, 0
      %v765 = vperm.slane %v700, 0
      %v766 = vperm.slane %v701, 0
      %v799 = vmul.f32 %v735, %v702
      %v800 = vmul.f32 %v736, %v702
      %v801 = vmul.f32 %v737, %v702
      %v802 = vmul.f32 %v738, %v702
      %v803 = vmul.f32 %v739, %v702
      %v804 = vmul.f32 %v740, %v702
      %v805 = vmul.f32 %v741, %v702
      %v806 = vmul.f32 %v742, %v702
      %v807 = vmul.f32 %v743, %v702
      %v808 = vmul.f32 %v744, %v702
      %v809 = vmul.f32 %v745, %v702
      %v810 = vmul.f32 %v746, %v702
      %v811 = vmul.f32 %v747, %v702
      %v812 = vmul.f32 %v748, %v702
      %v813 = vmul.f32 %v749, %v702
      %v814 = vmul.f32 %v750, %v702
      %v815 = vmul.f32 %v751, %v702
      %v816 = vmul.f32 %v752, %v702
      %v817 = vmul.f32 %v753, %v702
      %v818 = vmul.f32 %v754, %v702
      %v819 = vmul.f32 %v755, %v702
      %v820 = vmul.f32 %v756, %v702
      %v821 = vmul.f32 %v757, %v702
      %v822 = vmul.f32 %v758, %v702
      %v823 = vmul.f32 %v759, %v702
      %v824 = vmul.f32 %v760, %v702
      %v825 = vmul.f32 %v761, %v702
      %v826 = vmul.f32 %v762, %v702
      %v827 = vmul.f32 %v763, %v702
      %v828 = vmul.f32 %v764, %v702
      %v829 = vmul.f32 %v765, %v702
      %v830 = vmul.f32 %v766, %v702
      %847 = vst [vmem:[#allocation1] ss:$2 sm:$0xff] %v799
      %s848 = scalar_lea.vmem [#allocation1], 1
      %849 = vst [vmem:[%s848] ss:$2 sm:$0xff] %v800
      %s850 = scalar_lea.vmem [#allocation1], 16
      %851 = vst [vmem:[%s850] ss:$2 sm:$0xff] %v801
      %s852 = scalar_lea.vmem [#allocation1], 17
      %853 = vst [vmem:[%s852] ss:$2 sm:$0xff] %v802
      %s854 = scalar_lea.vmem [#allocation1], 32
      %855 = vst [vmem:[%s854] ss:$2 sm:$0xff] %v803
      %s856 = scalar_lea.vmem [#allocation1], 33
      %857 = vst [vmem:[%s856] ss:$2 sm:$0xff] %v804
      %s858 = scalar_lea.vmem [#allocation1], 48
      %859 = vst [vmem:[%s858] ss:$2 sm:$0xff] %v805
      %s860 = scalar_lea.vmem [#allocation1], 49
      %861 = vst [vmem:[%s860] ss:$2 sm:$0xff] %v806
      %v862 = vld.sshfl [vmem:[#allocation1] sm:$0xff pattern:$0x75316420]
      %v863 = vld.sshfl [vmem:[#allocation1 + $0x10] sm:$0xff pattern:$0x75316420]
      %v864 = vld.sshfl [vmem:[#allocation1 + $0x20] sm:$0xff pattern:$0x75316420]
      %v865 = vld.sshfl [vmem:[#allocation1 + $0x30] sm:$0xff pattern:$0x75316420]
      %866 = vst [vmem:[#allocation1] ss:$2 sm:$0xff] %v807
      %867 = vst [vmem:[%s848] ss:$2 sm:$0xff] %v808
      %868 = vst [vmem:[%s850] ss:$2 sm:$0xff] %v809
      %869 = vst [vmem:[%s852] ss:$2 sm:$0xff] %v810
      %870 = vst [vmem:[%s854] ss:$2 sm:$0xff] %v811
      %871 = vst [vmem:[%s856] ss:$2 sm:$0xff] %v812
      %872 = vst [vmem:[%s858] ss:$2 sm:$0xff] %v813
      %873 = vst [vmem:[%s860] ss:$2 sm:$0xff] %v814
      %v874 = vld.sshfl [vmem:[#allocation1] sm:$0xff pattern:$0x75316420]
      %v875 = vld.sshfl [vmem:[#allocation1 + $0x10] sm:$0xff pattern:$0x75316420]
      %v876 = vld.sshfl [vmem:[#allocation1 + $0x20] sm:$0xff pattern:$0x75316420]
      %v877 = vld.sshfl [vmem:[#allocation1 + $0x30] sm:$0xff pattern:$0x75316420]
      %vm878 = vcmask 261120
      %v879 = vsel %vm878, %v471, 0
      %v881 = vsel %vm878, %v862, 0
      %v883 = vsel %vm878, %v863, 0
      %v885 = vsel %vm878, %v864, 0
      %v887 = vsel %vm878, %v865, 0
      %v889 = vsel %vm878, %v874, 0
      %v891 = vsel %vm878, %v875, 0
      %v893 = vsel %vm878, %v876, 0
      %v895 = vsel %vm878, %v877, 0
      %897 = vmatpush.xpose.msra.mxu0 0.0
      %898 = vmatpush.xpose.msra.mxu0 0.0
      %899 = vmatpush.xpose.msra.mxu0 0.0
      %900 = vmatpush.xpose.msra.mxu0 0.0
      %901 = vmatpush.xpose.msra.mxu0 0.0
      %902 = vmatpush.xpose.msra.mxu0 0.0
      %903 = vmatpush.xpose.msra.mxu0 0.0
      %904 = vmatpush.xpose.msra.mxu0 0.0
      %905 = vmatpush.xpose.msra.mxu0 %v895
      %906 = vmatpush.xpose.msra.mxu0 %v893
      %907 = vmatpush.xpose.msra.mxu0 %v891
      %908 = vmatpush.xpose.msra.mxu0 %v889
      %909 = vmatpush.xpose.msra.mxu0 %v887
      %910 = vmatpush.xpose.msra.mxu0 %v885
      %911 = vmatpush.xpose.msra.mxu0 %v883
      %912 = vmatpush.xpose.msra.mxu0 %v881
      %913 = vmatmul.f32.gmra.mxu0 %v879
      %v914 = vpop.f32.mrf.mxu0
      %v915 = vadd.f32 0.0, %v914
      %916 = vdwg.mxu0
      %933 = vst [vmem:[#allocation1] ss:$2 sm:$0xff] %v815
      %s934 = scalar_lea.vmem [#allocation1], 1
      %935 = vst [vmem:[%s934] ss:$2 sm:$0xff] %v816
      %s936 = scalar_lea.vmem [#allocation1], 16
      %937 = vst [vmem:[%s936] ss:$2 sm:$0xff] %v817
      %s938 = scalar_lea.vmem [#allocation1], 17
      %939 = vst [vmem:[%s938] ss:$2 sm:$0xff] %v818
      %s940 = scalar_lea.vmem [#allocation1], 32
      %941 = vst [vmem:[%s940] ss:$2 sm:$0xff] %v819
      %s942 = scalar_lea.vmem [#allocation1], 33
      %943 = vst [vmem:[%s942] ss:$2 sm:$0xff] %v820
      %s944 = scalar_lea.vmem [#allocation1], 48
      %945 = vst [vmem:[%s944] ss:$2 sm:$0xff] %v821
      %s946 = scalar_lea.vmem [#allocation1], 49
      %947 = vst [vmem:[%s946] ss:$2 sm:$0xff] %v822
      %v948 = vld.sshfl [vmem:[#allocation1] sm:$0xff pattern:$0x75316420]
      %v949 = vld.sshfl [vmem:[#allocation1 + $0x10] sm:$0xff pattern:$0x75316420]
      %v950 = vld.sshfl [vmem:[#allocation1 + $0x20] sm:$0xff pattern:$0x75316420]
      %v951 = vld.sshfl [vmem:[#allocation1 + $0x30] sm:$0xff pattern:$0x75316420]
      %952 = vst [vmem:[#allocation1] ss:$2 sm:$0xff] %v823
      %953 = vst [vmem:[%s934] ss:$2 sm:$0xff] %v824
      %954 = vst [vmem:[%s936] ss:$2 sm:$0xff] %v825
      %955 = vst [vmem:[%s938] ss:$2 sm:$0xff] %v826
      %956 = vst [vmem:[%s940] ss:$2 sm:$0xff] %v827
      %957 = vst [vmem:[%s942] ss:$2 sm:$0xff] %v828
      %958 = vst [vmem:[%s944] ss:$2 sm:$0xff] %v829
      %959 = vst [vmem:[%s946] ss:$2 sm:$0xff] %v830
      %v960 = vld.sshfl [vmem:[#allocation1] sm:$0xff pattern:$0x75316420]
      %v961 = vld.sshfl [vmem:[#allocation1 + $0x10] sm:$0xff pattern:$0x75316420]
      %v962 = vld.sshfl [vmem:[#allocation1 + $0x20] sm:$0xff pattern:$0x75316420]
      %v963 = vld.sshfl [vmem:[#allocation1 + $0x30] sm:$0xff pattern:$0x75316420]
      %v964 = vsel %vm878, %v639, 0
      %v966 = vsel %vm878, %v948, 0
      %v968 = vsel %vm878, %v949, 0
      %v970 = vsel %vm878, %v950, 0
      %v972 = vsel %vm878, %v951, 0
      %v974 = vsel %vm878, %v960, 0
      %v976 = vsel %vm878, %v961, 0
      %v978 = vsel %vm878, %v962, 0
      %v980 = vsel %vm878, %v963, 0
      %982 = vmatpush.xpose.msra.mxu0 0.0
      %983 = vmatpush.xpose.msra.mxu0 0.0
      %984 = vmatpush.xpose.msra.mxu0 0.0
      %985 = vmatpush.xpose.msra.mxu0 0.0
      %986 = vmatpush.xpose.msra.mxu0 0.0
      %987 = vmatpush.xpose.msra.mxu0 0.0
      %988 = vmatpush.xpose.msra.mxu0 0.0
      %989 = vmatpush.xpose.msra.mxu0 0.0
      %990 = vmatpush.xpose.msra.mxu0 %v980
      %991 = vmatpush.xpose.msra.mxu0 %v978
      %992 = vmatpush.xpose.msra.mxu0 %v976
      %993 = vmatpush.xpose.msra.mxu0 %v974
      %994 = vmatpush.xpose.msra.mxu0 %v972
      %995 = vmatpush.xpose.msra.mxu0 %v970
      %996 = vmatpush.xpose.msra.mxu0 %v968
      %997 = vmatpush.xpose.msra.mxu0 %v966
      %998 = vmatmul.f32.gmra.mxu0 %v964
      %v999 = vpop.f32.mrf.mxu0
      %v1000 = vadd.f32 0.0, %v999
      %1001 = vdwg.mxu0
      %vm1002 = vcmask 519168
      %1003 = vst.msk [vmem:[%s390] sm:$0xf] %vm1002, %v915
      %1004 = vst.msk [vmem:[%s390 + $0x4] sm:$0xf] %vm1002, %v1000
      %s1005 = smul.u32 2, %s21
      %p1006 = scmp.lt.s32.totalorder %s1005, 3
      %s1007 = scalar_select %p1006, %s1005, 3
      %s1008 = smul.addr %s1007, 4
      %s1009 = scalar_lea.vmem %s10, %s1008
      // Predicated region
      $region61: #{factorized_trilinear.1} parent=59 // pred_check
        %p1010 = pneg %p264
      $region62: #{factorized_trilinear.1} parent=59 // pred_check_branch
        %1012 = sbr.rel (%p1010) target = $region64
      $region63: #{factorized_trilinear.1} parent=59 // pred_region
        %s1013 = smul.u32 2, %s21
      $region64: #{factorized_trilinear.1} parent=59 // pred_fallthru
        _
    $region60: #{factorized_trilinear.1} parent=5 // pred_fallthru
      _
    %p1014 = scmp.le.s32.totalorder 2, %s16
    // Predicated region
    $region65: #{factorized_trilinear.1} parent=5 // pred_check
      %p1015 = pneg %p1014
    $region66: #{factorized_trilinear.1} parent=5 // pred_check_branch
      %1017 = sbr.rel (%p1015) target = $region68
    $region67: #{factorized_trilinear.1} parent=5 // pred_region
      %s1018 = ssub.s32 %s16, 2
      // Predicated region
      $region69: #{factorized_trilinear.1} parent=67 // pred_check
        %p1019 = pneg %p270
      $region70: #{factorized_trilinear.1} parent=67 // pred_check_branch
        %1021 = sbr.rel (%p1019) target = $region72
      $region71: #{factorized_trilinear.1} parent=67 // pred_region
        %s1022 = smul.u32 2, %s22
        %p1023 = scmp.lt.s32.totalorder %s1022, 3
        %s1024 = scalar_select %p1023, %s1022, 3
        %s1025 = smul.addr %s1024, 4
        %s1026 = scalar_lea.vmem %s10, %s1025
      $region72: #{factorized_trilinear.1} parent=67 // pred_fallthru
        _
    $region68: #{factorized_trilinear.1} parent=5 // pred_fallthru
      _
  $region6: #{factorized_trilinear.1} parent=0 // loop_footer
    %s20 = sadd.s32 1, %s16
  $region7: #{factorized_trilinear.1} parent=0 // loop_footer_branch
    %15 = sbr.rel target = $region3
  $region8: #{factorized_trilinear.1} parent=0 // loop_exit
    _

</llo_original>
